<compile_context>
chip_gen: v5e
topology: v5e:2x2
jax: 0.10.0
libtpu: 0.0.40
codegen_flags: <defaults>
</compile_context>

<pallas_src>
import jax
import jax.numpy as jnp
from jax.experimental import pallas as pl
from jax.experimental.pallas import tpu as pltpu
import numpy as np


def make_attention_kernel(heads, head_dim, scale):
    def kernel(x_ref, c_ref, wq_ref, wk_ref, wv_ref, wout_ref, bout_ref,
               o_ref, q_sc, m_sc, l_sc, acc_sc):
        # Block shapes:
        #   x_ref:   (1, tq, Dq)        c_ref:   (1, tkv, Dc)
        #   wq_ref:  (Dq, inner)        wk_ref/wv_ref: (Dc, inner)
        #   wout_ref:(H, d, Dout)       bout_ref:(1, Dout)
        #   o_ref:   (1, tq, Dout)
        # Scratch (persists across the KV grid axis):
        #   q_sc: (H, tq, d) input dtype; m_sc/l_sc: (H, tq, 1) f32; acc_sc: (H, tq, d) f32
        ki = pl.program_id(2)
        tq = x_ref.shape[1]
        tkv = c_ref.shape[1]

        @pl.when(ki == 0)
        def _init():
            x = x_ref[0]                                    # (tq, Dq), native dtype -> MXU
            q = jnp.dot(x, wq_ref[...])                     # (tq, inner)
            q = q * scale                                   # fold softmax scale into q
            q = q.reshape(tq, heads, head_dim)
            q_sc[...] = jnp.transpose(q, (1, 0, 2)).astype(q_sc.dtype)  # (H, tq, d)
            m_sc[...] = jnp.full(m_sc.shape, -jnp.inf, jnp.float32)
            l_sc[...] = jnp.zeros(l_sc.shape, jnp.float32)
            acc_sc[...] = jnp.zeros(acc_sc.shape, jnp.float32)

        c = c_ref[0]                                        # (tkv, Dc), native dtype
        k = jnp.dot(c, wk_ref[...])                         # (tkv, inner)
        v = jnp.dot(c, wv_ref[...])                         # (tkv, inner)
        k = jnp.transpose(k.reshape(tkv, heads, head_dim), (1, 0, 2))   # (H, tkv, d)
        v = jnp.transpose(v.reshape(tkv, heads, head_dim), (1, 0, 2))   # (H, tkv, d)

        # head-batched QK^T (scale already folded into q)
        s = jnp.einsum('hqd,hkd->hqk', q_sc[...], k,
                       preferred_element_type=jnp.float32)  # (H, tq, tkv) f32

        # online softmax update
        m_prev = m_sc[...]
        m_new = jnp.maximum(m_prev, jnp.max(s, axis=-1, keepdims=True))
        alpha = jnp.exp(m_prev - m_new)                     # (H, tq, 1)
        p = jnp.exp(s - m_new)                              # (H, tq, tkv)
        l_sc[...] = alpha * l_sc[...] + jnp.sum(p, axis=-1, keepdims=True)
        acc_sc[...] = alpha * acc_sc[...] + jnp.einsum(
            'hqk,hkd->hqd', p.astype(v.dtype), v,
            preferred_element_type=jnp.float32)             # (H, tq, d)
        m_sc[...] = m_new

        @pl.when(ki == pl.num_programs(2) - 1)
        def _finalize():
            out_h = acc_sc[...] * pl.reciprocal(l_sc[...], approx=True)   # (H, tq, d)
            # head-batched output projection; "concat over heads" becomes a sum over H
            o = jnp.einsum('hqd,hdo->hqo', out_h, wout_ref[...].astype(jnp.float32),
                           preferred_element_type=jnp.float32)            # (H, tq, Dout)
            o = jnp.sum(o, axis=0) + bout_ref[...].astype(jnp.float32)    # (tq, Dout)
            o_ref[0] = o.astype(o_ref.dtype)

    return kernel


def _pick_tile(n, candidates):
    for t in candidates:
        if n % t == 0:
            return t
    return n


def mamba_attention_transformer(x, context, params, heads, head_dim):
    """x: (B, N, Dq), context: (B, M, Dc) or None -> (B, N, Dout)."""
    if context is None:
        context = x
    wq, wkv, wout, bout = params
    B, N, Dq = x.shape
    _, M, Dc = context.shape
    inner = heads * head_dim
    Dout = wout.shape[1]
    scale = float(head_dim) ** -0.5

    # wrapper-side weight plumbing (tiny, one-off): split kv, head-major wout, 2D bias
    wk = wkv[:, :inner]
    wv = wkv[:, inner:]
    wout_h = wout.reshape(heads, head_dim, Dout)
    bout2d = bout.reshape(1, Dout)

    # tile sizes: full-dim fallback for small sequences keeps the flash path degenerate
    tq = _pick_tile(N, (256, 128))
    tkv = _pick_tile(M, (512, 256, 128))
    nq, nk = N // tq, M // tkv

    kernel = make_attention_kernel(heads, head_dim, scale)

    return pl.pallas_call(
        kernel,
        out_shape=jax.ShapeDtypeStruct((B, N, Dout), x.dtype),
        grid_spec=pltpu.PrefetchScalarGridSpec(
            num_scalar_prefetch=0,
            grid=(B, nq, nk),
            in_specs=[
                pl.BlockSpec((1, tq, Dq), lambda b, qi, ki: (b, qi, 0)),
                pl.BlockSpec((1, tkv, Dc), lambda b, qi, ki: (b, ki, 0)),
                pl.BlockSpec((Dq, inner), lambda b, qi, ki: (0, 0)),
                pl.BlockSpec((Dc, inner), lambda b, qi, ki: (0, 0)),
                pl.BlockSpec((Dc, inner), lambda b, qi, ki: (0, 0)),
                pl.BlockSpec((heads, head_dim, Dout), lambda b, qi, ki: (0, 0, 0)),
                pl.BlockSpec((1, Dout), lambda b, qi, ki: (0, 0)),
            ],
            out_specs=pl.BlockSpec((1, tq, Dout), lambda b, qi, ki: (b, qi, 0)),
            scratch_shapes=[
                pltpu.VMEM((heads, tq, head_dim), x.dtype),      # cached (scaled) q
                pltpu.VMEM((heads, tq, 1), jnp.float32),         # running max
                pltpu.VMEM((heads, tq, 1), jnp.float32),         # running denom
                pltpu.VMEM((heads, tq, head_dim), jnp.float32),  # output accumulator
            ],
        ),
        compiler_params=pltpu.CompilerParams(
            dimension_semantics=("parallel", "parallel", "arbitrary"),
        ),
    )(x, context, wq, wk, wv, wout_h, bout2d)


def reference_attention(x, context, params, heads, head_dim):
    """Pure-JAX reference matching the PyTorch forward (transformer branch)."""
    if context is None:
        context = x
    wq, wkv, wout, bout = params
    scale = float(head_dim) ** -0.5
    B, N, _ = x.shape
    inner = heads * head_dim

    q = x @ wq
    kv = context @ wkv
    k, v = kv[..., :inner], kv[..., inner:]

    def split_heads(t):
        b, n, _ = t.shape
        return t.reshape(b, n, heads, head_dim).transpose(0, 2, 1, 3)

    qh, kh, vh = map(split_heads, (q, k, v))
    sim = jnp.einsum("bhid,bhjd->bhij", qh, kh) * scale
    attn = jax.nn.softmax(sim, axis=-1)
    out = jnp.einsum("bhij,bhjd->bhid", attn, vh)
    out = out.transpose(0, 2, 1, 3).reshape(B, N, inner)
    return out @ wout + bout


if __name__ == "__main__":
    # Small config consistent with the module's __init__ (transformer branch):
    # query_channel=8, context_channel=None->8, output_channel=None->8,
    # heads_num=2, heads_channel=16 -> inner_channel=32.
    B, N = 2, 8
    query_channel = 8
    heads_num, heads_channel = 2, 16
    inner = heads_num * heads_channel
    context_channel = query_channel
    output_channel = query_channel

    key = jax.random.PRNGKey(0)
    kx, kq, kkv, kw, kb, kx2 = jax.random.split(key, 6)

    x = jax.random.normal(kx, (B, N, query_channel), dtype=jnp.float32)

    # deterministic synthetic weights in (in, out) layout
    wq = 0.1 * jax.random.normal(kq, (query_channel, inner), dtype=jnp.float32)
    wkv = 0.1 * jax.random.normal(kkv, (context_channel, 2 * inner), dtype=jnp.float32)
    wout = 0.1 * jax.random.normal(kw, (inner, output_channel), dtype=jnp.float32)
    bout = 0.1 * jax.random.normal(kb, (output_channel,), dtype=jnp.float32)
    params = (wq, wkv, wout, bout)

    # 1) toy shape: single KV block per (batch, q-tile) -> degenerate flash path
    out = mamba_attention_transformer(x, None, params, heads_num, heads_channel)
    out = jax.block_until_ready(out)
    ref = reference_attention(x, None, params, heads_num, heads_channel)
    np.testing.assert_allclose(np.asarray(out), np.asarray(ref), rtol=2e-3, atol=2e-3)

    # 2) longer sequence: exercises the tiled online-softmax accumulation
    #    (grid over query tiles and multiple KV steps).
    N2 = 1024
    x2 = jax.random.normal(kx2, (B, N2, query_channel), dtype=jnp.float32)
    out2 = mamba_attention_transformer(x2, None, params, heads_num, heads_channel)
    out2 = jax.block_until_ready(out2)
    ref2 = reference_attention(x2, None, params, heads_num, heads_channel)
    np.testing.assert_allclose(np.asarray(out2), np.asarray(ref2), rtol=2e-3, atol=2e-3)

    # TODO(synk): the 'mamba' branch (create_block / Mamba selective-scan mixer) is not
    # exercised by the default constructor and is out of scope here; mask handling and
    # dropout are identity in this forward path (mask=None, p=0.0).
    print("KERNEL_OK")
</pallas_src>

<mosaic_0001>
module attributes {stable_mosaic.version = 11 : i64} {
  func.func @kernel(%arg0: i32, %arg1: i32, %arg2: i32, %arg3: memref<1x8x8xf32, #tpu.memory_space<vmem>>, %arg4: memref<1x8x8xf32, #tpu.memory_space<vmem>>, %arg5: memref<8x32xf32, #tpu.memory_space<vmem>>, %arg6: memref<8x32xf32, #tpu.memory_space<vmem>>, %arg7: memref<8x32xf32, #tpu.memory_space<vmem>>, %arg8: memref<2x16x8xf32, #tpu.memory_space<vmem>>, %arg9: memref<1x8xf32, #tpu.memory_space<vmem>>, %arg10: memref<1x8x8xf32, #tpu.memory_space<vmem>>, %arg11: memref<2x8x16xf32, #tpu.memory_space<vmem>>, %arg12: memref<2x8x1xf32, #tpu.memory_space<vmem>>, %arg13: memref<2x8x1xf32, #tpu.memory_space<vmem>>, %arg14: memref<2x8x16xf32, #tpu.memory_space<vmem>>) attributes {dimension_semantics = [#tpu.dimension_semantics<parallel>, #tpu.dimension_semantics<parallel>, #tpu.dimension_semantics<arbitrary>], iteration_bounds = array<i64: 2, 1, 1>, scalar_prefetch = 0 : i64, scratch_operands = 4 : i64, tpu.core_type = #tpu.core_type<tc>, window_params = [{transform_indices = @transform_0, window_bounds = array<i64: 1, 8, 8>}, {transform_indices = @transform_1, window_bounds = array<i64: 1, 8, 8>}, {pipeline_mode = #tpu.pipeline_mode<synchronous>, transform_indices = @transform_2, window_bounds = array<i64: 8, 32>}, {pipeline_mode = #tpu.pipeline_mode<synchronous>, transform_indices = @transform_3, window_bounds = array<i64: 8, 32>}, {pipeline_mode = #tpu.pipeline_mode<synchronous>, transform_indices = @transform_4, window_bounds = array<i64: 8, 32>}, {pipeline_mode = #tpu.pipeline_mode<synchronous>, transform_indices = @transform_5, window_bounds = array<i64: 2, 16, 8>}, {pipeline_mode = #tpu.pipeline_mode<synchronous>, transform_indices = @transform_6, window_bounds = array<i64: 1, 8>}, {transform_indices = @transform_7, window_bounds = array<i64: 1, 8, 8>}]} {
    %c0_i32 = arith.constant 0 : i32
    %0 = arith.cmpi eq, %arg2, %c0_i32 : i32
    %1 = arith.extui %0 : i1 to i32
    %c0_i32_0 = arith.constant 0 : i32
    %2 = arith.cmpi ne, %1, %c0_i32_0 : i32
    scf.if %2 {
      %c0_35 = arith.constant 0 : index
      %c0_36 = arith.constant 0 : index
      %c0_37 = arith.constant 0 : index
      %40 = vector.load %arg3[%c0_35, %c0_36, %c0_37] : memref<1x8x8xf32, #tpu.memory_space<vmem>>, vector<1x8x8xf32>
      %41 = vector.shape_cast %40 : vector<1x8x8xf32> to vector<8x8xf32>
      %c0_38 = arith.constant 0 : index
      %c0_39 = arith.constant 0 : index
      %42 = vector.load %arg5[%c0_38, %c0_39] : memref<8x32xf32, #tpu.memory_space<vmem>>, vector<8x32xf32>
      %cst_40 = arith.constant dense<0.000000e+00> : vector<8x32xf32>
      %43 = tpu.matmul %41, %42, %cst_40 {dimension_numbers = #tpu.dot_dimension_numbers<[1], [0], [0], [1], [0, 0, 1, 1], [], []>} : vector<8x8xf32>, vector<8x32xf32>, vector<8x32xf32> -> vector<8x32xf32>
      %cst_41 = arith.constant 2.500000e-01 : f32
      %44 = vector.broadcast %cst_41 : f32 to vector<8x32xf32>
      %45 = arith.mulf %43, %44 : vector<8x32xf32>
      %46 = vector.shape_cast %45 : vector<8x32xf32> to vector<8x2x16xf32>
      %47 = tpu.transpose %46, [1, 0, 2] : vector<8x2x16xf32> -> vector<2x8x16xf32>
      %c0_42 = arith.constant 0 : index
      %c0_43 = arith.constant 0 : index
      %c0_44 = arith.constant 0 : index
      %48 = vector.load %arg11[%c0_42, %c0_43, %c0_44] : memref<2x8x16xf32, #tpu.memory_space<vmem>>, vector<2x8x16xf32>
      tpu.vector_store %arg11[%c0_42, %c0_43, %c0_44], %47 {strides = array<i32>} : memref<2x8x16xf32, #tpu.memory_space<vmem>>, vector<2x8x16xf32>,
      %cst_45 = arith.constant 0xFF800000 : f32
      %49 = vector.broadcast %cst_45 : f32 to vector<2x8x1xf32>
      %c0_46 = arith.constant 0 : index
      %c0_47 = arith.constant 0 : index
      %c0_48 = arith.constant 0 : index
      %50 = vector.load %arg12[%c0_46, %c0_47, %c0_48] : memref<2x8x1xf32, #tpu.memory_space<vmem>>, vector<2x8x1xf32>
      tpu.vector_store %arg12[%c0_46, %c0_47, %c0_48], %49 {strides = array<i32>} : memref<2x8x1xf32, #tpu.memory_space<vmem>>, vector<2x8x1xf32>,
      %cst_49 = arith.constant 0.000000e+00 : f32
      %51 = vector.broadcast %cst_49 : f32 to vector<2x8x1xf32>
      %c0_50 = arith.constant 0 : index
      %c0_51 = arith.constant 0 : index
      %c0_52 = arith.constant 0 : index
      %52 = vector.load %arg13[%c0_50, %c0_51, %c0_52] : memref<2x8x1xf32, #tpu.memory_space<vmem>>, vector<2x8x1xf32>
      tpu.vector_store %arg13[%c0_50, %c0_51, %c0_52], %51 {strides = array<i32>} : memref<2x8x1xf32, #tpu.memory_space<vmem>>, vector<2x8x1xf32>,
      %cst_53 = arith.constant 0.000000e+00 : f32
      %53 = vector.broadcast %cst_53 : f32 to vector<2x8x16xf32>
      %c0_54 = arith.constant 0 : index
      %c0_55 = arith.constant 0 : index
      %c0_56 = arith.constant 0 : index
      %54 = vector.load %arg14[%c0_54, %c0_55, %c0_56] : memref<2x8x16xf32, #tpu.memory_space<vmem>>, vector<2x8x16xf32>
      tpu.vector_store %arg14[%c0_54, %c0_55, %c0_56], %53 {strides = array<i32>} : memref<2x8x16xf32, #tpu.memory_space<vmem>>, vector<2x8x16xf32>,
    } else {
    }
    %c0 = arith.constant 0 : index
    %c0_1 = arith.constant 0 : index
    %c0_2 = arith.constant 0 : index
    %3 = vector.load %arg4[%c0, %c0_1, %c0_2] : memref<1x8x8xf32, #tpu.memory_space<vmem>>, vector<1x8x8xf32>
    %4 = vector.shape_cast %3 : vector<1x8x8xf32> to vector<8x8xf32>
    %c0_3 = arith.constant 0 : index
    %c0_4 = arith.constant 0 : index
    %5 = vector.load %arg6[%c0_3, %c0_4] : memref<8x32xf32, #tpu.memory_space<vmem>>, vector<8x32xf32>
    %cst = arith.constant dense<0.000000e+00> : vector<8x32xf32>
    %6 = tpu.matmul %4, %5, %cst {dimension_numbers = #tpu.dot_dimension_numbers<[1], [0], [0], [1], [0, 0, 1, 1], [], []>} : vector<8x8xf32>, vector<8x32xf32>, vector<8x32xf32> -> vector<8x32xf32>
    %c0_5 = arith.constant 0 : index
    %c0_6 = arith.constant 0 : index
    %7 = vector.load %arg7[%c0_5, %c0_6] : memref<8x32xf32, #tpu.memory_space<vmem>>, vector<8x32xf32>
    %cst_7 = arith.constant dense<0.000000e+00> : vector<8x32xf32>
    %8 = tpu.matmul %4, %7, %cst_7 {dimension_numbers = #tpu.dot_dimension_numbers<[1], [0], [0], [1], [0, 0, 1, 1], [], []>} : vector<8x8xf32>, vector<8x32xf32>, vector<8x32xf32> -> vector<8x32xf32>
    %9 = vector.shape_cast %6 : vector<8x32xf32> to vector<8x2x16xf32>
    %10 = tpu.transpose %9, [1, 0, 2] : vector<8x2x16xf32> -> vector<2x8x16xf32>
    %11 = vector.shape_cast %8 : vector<8x32xf32> to vector<8x2x16xf32>
    %12 = tpu.transpose %11, [1, 0, 2] : vector<8x2x16xf32> -> vector<2x8x16xf32>
    %c0_8 = arith.constant 0 : index
    %c0_9 = arith.constant 0 : index
    %c0_10 = arith.constant 0 : index
    %13 = vector.load %arg11[%c0_8, %c0_9, %c0_10] : memref<2x8x16xf32, #tpu.memory_space<vmem>>, vector<2x8x16xf32>
    "tpu.trace_start"() <{level = 10 : i32, message = "hqd,hkd->hqk"}> : () -> ()
    %cst_11 = arith.constant dense<0.000000e+00> : vector<2x8x8xf32>
    %14 = tpu.matmul %13, %10, %cst_11 {dimension_numbers = #tpu.dot_dimension_numbers<[2], [2], [1], [1], [0, 0, 0, 1, 1, 1], [0], [0]>} : vector<2x8x16xf32>, vector<2x8x16xf32>, vector<2x8x8xf32> -> vector<2x8x8xf32>
    "tpu.trace_stop"() : () -> ()
    %c0_12 = arith.constant 0 : index
    %c0_13 = arith.constant 0 : index
    %c0_14 = arith.constant 0 : index
    %15 = vector.load %arg12[%c0_12, %c0_13, %c0_14] : memref<2x8x1xf32, #tpu.memory_space<vmem>>, vector<2x8x1xf32>
    %cst_15 = arith.constant dense<0xFF800000> : vector<2x8xf32>
    %16 = vector.multi_reduction <maximumf>, %14, %cst_15 [2] : vector<2x8x8xf32> to vector<2x8xf32>
    %17 = vector.shape_cast %16 : vector<2x8xf32> to vector<2x8x1xf32>
    %18 = arith.maximumf %15, %17 : vector<2x8x1xf32>
    %19 = arith.subf %15, %18 : vector<2x8x1xf32>
    %20 = math.exp %19 : vector<2x8x1xf32>
    %21 = vector.broadcast %18 : vector<2x8x1xf32> to vector<2x8x8xf32>
    %22 = arith.subf %14, %21 : vector<2x8x8xf32>
    %23 = math.exp %22 : vector<2x8x8xf32>
    %c0_16 = arith.constant 0 : index
    %c0_17 = arith.constant 0 : index
    %c0_18 = arith.constant 0 : index
    %24 = vector.load %arg13[%c0_16, %c0_17, %c0_18] : memref<2x8x1xf32, #tpu.memory_space<vmem>>, vector<2x8x1xf32>
    %25 = arith.mulf %20, %24 : vector<2x8x1xf32>
    %cst_19 = arith.constant dense<0.000000e+00> : vector<2x8xf32>
    %26 = vector.multi_reduction <add>, %23, %cst_19 [2] : vector<2x8x8xf32> to vector<2x8xf32>
    %27 = vector.shape_cast %26 : vector<2x8xf32> to vector<2x8x1xf32>
    %28 = arith.addf %25, %27 : vector<2x8x1xf32>
    %c0_20 = arith.constant 0 : index
    %c0_21 = arith.constant 0 : index
    %c0_22 = arith.constant 0 : index
    %29 = vector.load %arg13[%c0_20, %c0_21, %c0_22] : memref<2x8x1xf32, #tpu.memory_space<vmem>>, vector<2x8x1xf32>
    tpu.vector_store %arg13[%c0_20, %c0_21, %c0_22], %28 {strides = array<i32>} : memref<2x8x1xf32, #tpu.memory_space<vmem>>, vector<2x8x1xf32>,
    %c0_23 = arith.constant 0 : index
    %c0_24 = arith.constant 0 : index
    %c0_25 = arith.constant 0 : index
    %30 = vector.load %arg14[%c0_23, %c0_24, %c0_25] : memref<2x8x16xf32, #tpu.memory_space<vmem>>, vector<2x8x16xf32>
    %31 = vector.broadcast %20 : vector<2x8x1xf32> to vector<2x8x16xf32>
    %32 = arith.mulf %31, %30 : vector<2x8x16xf32>
    "tpu.trace_start"() <{level = 10 : i32, message = "hqk,hkd->hqd"}> : () -> ()
    %cst_26 = arith.constant dense<0.000000e+00> : vector<2x8x16xf32>
    %33 = tpu.matmul %23, %12, %cst_26 {dimension_numbers = #tpu.dot_dimension_numbers<[2], [1], [1], [2], [0, 0, 0, 1, 1, 2], [0], [0]>} : vector<2x8x8xf32>, vector<2x8x16xf32>, vector<2x8x16xf32> -> vector<2x8x16xf32>
    "tpu.trace_stop"() : () -> ()
    %34 = arith.addf %32, %33 : vector<2x8x16xf32>
    %c0_27 = arith.constant 0 : index
    %c0_28 = arith.constant 0 : index
    %c0_29 = arith.constant 0 : index
    %35 = vector.load %arg14[%c0_27, %c0_28, %c0_29] : memref<2x8x16xf32, #tpu.memory_space<vmem>>, vector<2x8x16xf32>
    tpu.vector_store %arg14[%c0_27, %c0_28, %c0_29], %34 {strides = array<i32>} : memref<2x8x16xf32, #tpu.memory_space<vmem>>, vector<2x8x16xf32>,
    %c0_30 = arith.constant 0 : index
    %c0_31 = arith.constant 0 : index
    %c0_32 = arith.constant 0 : index
    %36 = vector.load %arg12[%c0_30, %c0_31, %c0_32] : memref<2x8x1xf32, #tpu.memory_space<vmem>>, vector<2x8x1xf32>
    tpu.vector_store %arg12[%c0_30, %c0_31, %c0_32], %18 {strides = array<i32>} : memref<2x8x1xf32, #tpu.memory_space<vmem>>, vector<2x8x1xf32>,
    %c0_i32_33 = arith.constant 0 : i32
    %37 = arith.cmpi eq, %arg2, %c0_i32_33 : i32
    %38 = arith.extui %37 : i1 to i32
    %c0_i32_34 = arith.constant 0 : i32
    %39 = arith.cmpi ne, %38, %c0_i32_34 : i32
    scf.if %39 {
      %c0_35 = arith.constant 0 : index
      %c0_36 = arith.constant 0 : index
      %c0_37 = arith.constant 0 : index
      %40 = vector.load %arg14[%c0_35, %c0_36, %c0_37] : memref<2x8x16xf32, #tpu.memory_space<vmem>>, vector<2x8x16xf32>
      %c0_38 = arith.constant 0 : index
      %c0_39 = arith.constant 0 : index
      %c0_40 = arith.constant 0 : index
      %41 = vector.load %arg13[%c0_38, %c0_39, %c0_40] : memref<2x8x1xf32, #tpu.memory_space<vmem>>, vector<2x8x1xf32>
      %42 = tpu.reciprocal %41 {approx = true} : vector<2x8x1xf32> -> vector<2x8x1xf32>
      %43 = vector.broadcast %42 : vector<2x8x1xf32> to vector<2x8x16xf32>
      %44 = arith.mulf %40, %43 : vector<2x8x16xf32>
      %c0_41 = arith.constant 0 : index
      %c0_42 = arith.constant 0 : index
      %c0_43 = arith.constant 0 : index
      %45 = vector.load %arg8[%c0_41, %c0_42, %c0_43] : memref<2x16x8xf32, #tpu.memory_space<vmem>>, vector<2x16x8xf32>
      "tpu.trace_start"() <{level = 10 : i32, message = "hqd,hdo->hqo"}> : () -> ()
      %cst_44 = arith.constant dense<0.000000e+00> : vector<2x8x8xf32>
      %46 = tpu.matmul %44, %45, %cst_44 {dimension_numbers = #tpu.dot_dimension_numbers<[2], [1], [1], [2], [0, 0, 0, 1, 1, 2], [0], [0]>} : vector<2x8x16xf32>, vector<2x16x8xf32>, vector<2x8x8xf32> -> vector<2x8x8xf32>
      "tpu.trace_stop"() : () -> ()
      %cst_45 = arith.constant dense<0.000000e+00> : vector<8x8xf32>
      %47 = vector.multi_reduction <add>, %46, %cst_45 [0] : vector<2x8x8xf32> to vector<8x8xf32>
      %c0_46 = arith.constant 0 : index
      %c0_47 = arith.constant 0 : index
      %48 = vector.load %arg9[%c0_46, %c0_47] : memref<1x8xf32, #tpu.memory_space<vmem>>, vector<1x8xf32>
      %49 = vector.broadcast %48 : vector<1x8xf32> to vector<8x8xf32>
      %50 = arith.addf %47, %49 : vector<8x8xf32>
      %c0_48 = arith.constant 0 : index
      %c0_49 = arith.constant 0 : index
      %c0_50 = arith.constant 0 : index
      %51 = vector.load %arg10[%c0_48, %c0_49, %c0_50] : memref<1x8x8xf32, #tpu.memory_space<vmem>>, vector<1x8x8xf32>
      %52 = vector.shape_cast %51 : vector<1x8x8xf32> to vector<8x8xf32>
      %53 = vector.shape_cast %50 : vector<8x8xf32> to vector<1x8x8xf32>
      tpu.vector_store %arg10[%c0_48, %c0_49, %c0_50], %53 {strides = array<i32>} : memref<1x8x8xf32, #tpu.memory_space<vmem>>, vector<1x8x8xf32>,
    } else {
    }
    return
  }
  func.func @transform_0(%arg0: i32, %arg1: i32, %arg2: i32) -> (i32, i32, i32) {
    %c0_i32 = arith.constant 0 : i32
    %c0_i32_0 = arith.constant 0 : i32
    return %arg0, %arg1, %c0_i32 : i32, i32, i32
  }
  func.func @transform_1(%arg0: i32, %arg1: i32, %arg2: i32) -> (i32, i32, i32) {
    %c0_i32 = arith.constant 0 : i32
    %c0_i32_0 = arith.constant 0 : i32
    return %arg0, %arg2, %c0_i32 : i32, i32, i32
  }
  func.func @transform_2(%arg0: i32, %arg1: i32, %arg2: i32) -> (i32, i32) {
    %c0_i32 = arith.constant 0 : i32
    %c0_i32_0 = arith.constant 0 : i32
    %c0_i32_1 = arith.constant 0 : i32
    return %c0_i32, %c0_i32_0 : i32, i32
  }
  func.func @transform_3(%arg0: i32, %arg1: i32, %arg2: i32) -> (i32, i32) {
    %c0_i32 = arith.constant 0 : i32
    %c0_i32_0 = arith.constant 0 : i32
    %c0_i32_1 = arith.constant 0 : i32
    return %c0_i32, %c0_i32_0 : i32, i32
  }
  func.func @transform_4(%arg0: i32, %arg1: i32, %arg2: i32) -> (i32, i32) {
    %c0_i32 = arith.constant 0 : i32
    %c0_i32_0 = arith.constant 0 : i32
    %c0_i32_1 = arith.constant 0 : i32
    return %c0_i32, %c0_i32_0 : i32, i32
  }
  func.func @transform_5(%arg0: i32, %arg1: i32, %arg2: i32) -> (i32, i32, i32) {
    %c0_i32 = arith.constant 0 : i32
    %c0_i32_0 = arith.constant 0 : i32
    %c0_i32_1 = arith.constant 0 : i32
    %c0_i32_2 = arith.constant 0 : i32
    return %c0_i32, %c0_i32_0, %c0_i32_1 : i32, i32, i32
  }
  func.func @transform_6(%arg0: i32, %arg1: i32, %arg2: i32) -> (i32, i32) {
    %c0_i32 = arith.constant 0 : i32
    %c0_i32_0 = arith.constant 0 : i32
    %c0_i32_1 = arith.constant 0 : i32
    return %c0_i32, %c0_i32_0 : i32, i32
  }
  func.func @transform_7(%arg0: i32, %arg1: i32, %arg2: i32) -> (i32, i32, i32) {
    %c0_i32 = arith.constant 0 : i32
    %c0_i32_0 = arith.constant 0 : i32
    return %arg0, %arg1, %c0_i32 : i32, i32, i32
  }
}

</mosaic_0001>

<llo_original>
// kernel: tpu_custom_call.1
$region0: #{tpu_custom_call.1}
  #allocation0 [shape = 'u32[]', space=smem, size = 0x4, offset = 0x4, fixed_abs, tag = 'smem constant byte address 0x4 - core index']
  #allocation1 [shape = 'u32[72,128]{1,0:T(1,128)}', space=vmem, size = 0x9000, scoped, tag = 'internal scratch']
  #allocation2 [shape = 'f32[2,8,16]{2,1,0:T(8,128)}', space=vmem, size = 0x2000, scoped, tag = 'scratch operand']
  #allocation3 [shape = 'f32[2,8,1]{2,1,0:T(8,128)}', space=vmem, size = 0x2000, scoped, tag = 'scratch operand']
  #allocation4 [shape = 'f32[2,8,1]{2,1,0:T(8,128)}', space=vmem, size = 0x2000, scoped, tag = 'scratch operand']
  #allocation5 [shape = 'f32[2,8,16]{2,1,0:T(8,128)}', space=vmem, size = 0x2000, scoped, tag = 'scratch operand']
  %s0 = inlined_call_operand.vmem [shape: f32[2,8,8], index: 0, kind: input, shape index: {}]
  %s1 = inlined_call_operand.vmem [shape: f32[2,8,8], index: 1, kind: input, shape index: {}]
  %s2 = inlined_call_operand.vmem [shape: f32[8,32], index: 2, kind: input, shape index: {}]
  %s3 = inlined_call_operand.vmem [shape: f32[8,32], index: 3, kind: input, shape index: {}]
  %s4 = inlined_call_operand.hbm [shape: f32[8,32], index: 4, kind: input, shape index: {}]
  %s5 = inlined_call_operand.vmem [shape: f32[2,16,8], index: 5, kind: input, shape index: {}]
  %s6 = inlined_call_operand.vmem [shape: f32[1,8], index: 6, kind: input, shape index: {}]
  %s7 = inlined_call_operand.hbm [shape: f32[2,8,8], index: 7, kind: output, shape index: {}]
  %s8 = sld [smem:[#allocation0]]
  $region73: #{tpu_custom_call.1} parent=0
    _
  %s10 = ssub.s32 1, %s8
  %s11 = scalar_select 0, %s10, %s8
  $region1: #{tpu_custom_call.1} parent=0
    #allocation6 [shape = 'u8[4096]{0}', space=vmem, size = 0x1000, scoped, tag = 'input window, operand 4, single buffered']
    #allocation7 [shape = 's32[2]{0}', space=sflag, size = 0x8, scoped, tag = 'scoped memory for tpu_custom_call.1']
    #allocation8 [shape = 's32[2]{0}', space=sflag, size = 0x8, scoped, tag = 'scoped memory for tpu_custom_call.1']
    #allocation9 [shape = 'u8[8192]{0}', space=vmem, size = 0x2000, scoped, tag = 'output window, operand 0']
    %12 = vsyncpa [#allocation7], 0
    %13 = vsyncpa [#allocation8], 0
    %s14 = scalar_lea.sflag [#allocation8], 1
    %15 = vsyncpa %s14, 0
    loop: start=0, step=1, limit=4
    $region2: #{tpu_custom_call.1} parent=1 // loop_pre_header
      _
    $region3: #{tpu_custom_call.1} parent=1 // loop_header
      %s17 = sphi 0, %s21
      %p18 = scmp.ge.s32.totalorder %s17, 4
      %s24 = sphi 0, %s43
      %s25 = sphi 0, %s39
      %s26 = sphi 0, %s35
      %s27 = sphi 0, %s24
      %s28 = sphi 0, %s25
      %s29 = sphi 0, %s26
      %s30 = sphi 0, %s27
      %s31 = sphi 0, %s28
      %s32 = sphi 0, %s29
      %s48 = sphi 0, %s50
      %s51 = sphi 0, %s48
      %s52 = sphi 0, %s51
      %s68 = sphi 0, %s52
      %s76 = sphi 0, %s78
      %s79 = sphi 0, %s76
      %s80 = sphi 0, %s79
      %s96 = sphi 0, %s80
      %s100 = sphi 0, %s100
      %s102 = sphi 0, %s100
      %s103 = sphi 0, %s102
      %s117 = sphi 0, %s103
      %s121 = sphi 0, %s121
      %s123 = sphi 0, %s121
      %s124 = sphi 0, %s123
      %s138 = sphi 0, %s124
      %s142 = sphi 0, %s142
      %s144 = sphi 0, %s142
      %s145 = sphi 0, %s144
      %s159 = sphi 0, %s145
      %s163 = sphi 0, %s163
      %s165 = sphi 0, %s163
      %s166 = sphi 0, %s165
      %s180 = sphi 0, %s166
      %s184 = sphi 0, %s184
      %s186 = sphi 0, %s184
      %s187 = sphi 0, %s186
      %s201 = sphi 0, %s187
      %s209 = sphi 0, %s211
      %s212 = sphi 0, %s209
      %s213 = sphi 0, %s212
      %s229 = sphi 0, %s213
    $region4: #{tpu_custom_call.1} parent=1 // loop_header_branch
      %20 = sbr.rel (%p18) target = $region8
    $region5: #{tpu_custom_call.1} parent=1 // loop_body
      %s22 = ssub.s32 %s17, 1
      %s23 = ssub.s32 %s17, 2
      %s33 = sadd.s32 1, %s26
      %p34 = scmp.ge.s32.totalorder %s33, 1
      %s35 = scalar_select %p34, 0, %s33
      %s36 = sadd.s32 1, %s25
      %s37 = scalar_select %p34, %s36, %s25
      %p38 = scmp.ge.s32.totalorder %s37, 1
      %s39 = scalar_select %p38, 0, %s37
      %s40 = sadd.s32 1, %s24
      %s41 = scalar_select %p38, %s40, %s24
      %p42 = scmp.ge.s32.totalorder %s41, 2
      %s43 = scalar_select %p42, 0, %s41
      %s44 = ssub.s32 %s24, %s43
      %s45 = ssub.s32 %s25, %s39
      %s46 = sor.u32 %s44, %s45
      %p47 = scmp.eq.s32.totalorder %s46, 0
      %s49 = sadd.s32 %s48, 1
      %s50 = scalar_select %p47, %s48, %s49
      %p53 = pneg %p47
      %p54 = scmp.eq.s32.totalorder %s17, 1
      %p55 = por %p53, %p54
      %p56 = scmp.ne.s32.totalorder %s48, %s51
      %p57 = scmp.eq.s32.totalorder %s17, 0
      %p58 = por %p56, %p57
      %p59 = scmp.ne.s32.totalorder %s48, %s51
      %p60 = scmp.eq.s32.totalorder %s22, 1
      %p61 = por %p59, %p60
      %p62 = scmp.ne.s32.totalorder %s51, %s52
      %p63 = scmp.eq.s32.totalorder %s22, 0
      %p64 = por %p62, %p63
      %p65 = scmp.ne.s32.totalorder %s51, %s52
      %p66 = scmp.eq.s32.totalorder %s23, 1
      %p67 = por %p65, %p66
      %p69 = scmp.ne.s32.totalorder %s52, %s68
      %p70 = scmp.eq.s32.totalorder %s23, 0
      %p71 = por %p69, %p70
      %s72 = ssub.s32 %s24, %s43
      %s73 = ssub.s32 %s26, %s35
      %s74 = sor.u32 %s72, %s73
      %p75 = scmp.eq.s32.totalorder %s74, 0
      %s77 = sadd.s32 %s76, 1
      %s78 = scalar_select %p75, %s76, %s77
      %p81 = pneg %p75
      %p82 = scmp.eq.s32.totalorder %s17, 1
      %p83 = por %p81, %p82
      %p84 = scmp.ne.s32.totalorder %s76, %s79
      %p85 = scmp.eq.s32.totalorder %s17, 0
      %p86 = por %p84, %p85
      %p87 = scmp.ne.s32.totalorder %s76, %s79
      %p88 = scmp.eq.s32.totalorder %s22, 1
      %p89 = por %p87, %p88
      %p90 = scmp.ne.s32.totalorder %s79, %s80
      %p91 = scmp.eq.s32.totalorder %s22, 0
      %p92 = por %p90, %p91
      %p93 = scmp.ne.s32.totalorder %s79, %s80
      %p94 = scmp.eq.s32.totalorder %s23, 1
      %p95 = por %p93, %p94
      %p97 = scmp.ne.s32.totalorder %s80, %s96
      %p98 = scmp.eq.s32.totalorder %s23, 0
      %p99 = por %p97, %p98
      %s101 = sadd.s32 %s100, 1
      %p104 = scmp.eq.s32.totalorder %s17, 1
      %p105 = scmp.ne.s32.totalorder %s100, %s102
      %p106 = scmp.eq.s32.totalorder %s17, 0
      %p107 = por %p105, %p106
      %p108 = scmp.ne.s32.totalorder %s100, %s102
      %p109 = scmp.eq.s32.totalorder %s22, 1
      %p110 = por %p108, %p109
      %p111 = scmp.ne.s32.totalorder %s102, %s103
      %p112 = scmp.eq.s32.totalorder %s22, 0
      %p113 = por %p111, %p112
      %p114 = scmp.ne.s32.totalorder %s102, %s103
      %p115 = scmp.eq.s32.totalorder %s23, 1
      %p116 = por %p114, %p115
      %p118 = scmp.ne.s32.totalorder %s103, %s117
      %p119 = scmp.eq.s32.totalorder %s23, 0
      %p120 = por %p118, %p119
      %s122 = sadd.s32 %s121, 1
      %p125 = scmp.eq.s32.totalorder %s17, 1
      %p126 = scmp.ne.s32.totalorder %s121, %s123
      %p127 = scmp.eq.s32.totalorder %s17, 0
      %p128 = por %p126, %p127
      %p129 = scmp.ne.s32.totalorder %s121, %s123
      %p130 = scmp.eq.s32.totalorder %s22, 1
      %p131 = por %p129, %p130
      %p132 = scmp.ne.s32.totalorder %s123, %s124
      %p133 = scmp.eq.s32.totalorder %s22, 0
      %p134 = por %p132, %p133
      %p135 = scmp.ne.s32.totalorder %s123, %s124
      %p136 = scmp.eq.s32.totalorder %s23, 1
      %p137 = por %p135, %p136
      %p139 = scmp.ne.s32.totalorder %s124, %s138
      %p140 = scmp.eq.s32.totalorder %s23, 0
      %p141 = por %p139, %p140
      %s143 = sadd.s32 %s142, 1
      %p146 = scmp.eq.s32.totalorder %s17, 1
      %p147 = scmp.ne.s32.totalorder %s142, %s144
      %p148 = scmp.eq.s32.totalorder %s17, 0
      %p149 = por %p147, %p148
      %p150 = scmp.ne.s32.totalorder %s142, %s144
      %p151 = scmp.eq.s32.totalorder %s22, 1
      %p152 = por %p150, %p151
      %p153 = scmp.ne.s32.totalorder %s144, %s145
      %p154 = scmp.eq.s32.totalorder %s22, 0
      %p155 = por %p153, %p154
      %p156 = scmp.ne.s32.totalorder %s144, %s145
      %p157 = scmp.eq.s32.totalorder %s23, 1
      %p158 = por %p156, %p157
      %p160 = scmp.ne.s32.totalorder %s145, %s159
      %p161 = scmp.eq.s32.totalorder %s23, 0
      %p162 = por %p160, %p161
      %s164 = sadd.s32 %s163, 1
      %p167 = scmp.eq.s32.totalorder %s17, 1
      %p168 = scmp.ne.s32.totalorder %s163, %s165
      %p169 = scmp.eq.s32.totalorder %s17, 0
      %p170 = por %p168, %p169
      %p171 = scmp.ne.s32.totalorder %s163, %s165
      %p172 = scmp.eq.s32.totalorder %s22, 1
      %p173 = por %p171, %p172
      %p174 = scmp.ne.s32.totalorder %s165, %s166
      %p175 = scmp.eq.s32.totalorder %s22, 0
      %p176 = por %p174, %p175
      %p177 = scmp.ne.s32.totalorder %s165, %s166
      %p178 = scmp.eq.s32.totalorder %s23, 1
      %p179 = por %p177, %p178
      %p181 = scmp.ne.s32.totalorder %s166, %s180
      %p182 = scmp.eq.s32.totalorder %s23, 0
      %p183 = por %p181, %p182
      %s185 = sadd.s32 %s184, 1
      %p188 = scmp.eq.s32.totalorder %s17, 1
      %p189 = scmp.ne.s32.totalorder %s184, %s186
      %p190 = scmp.eq.s32.totalorder %s17, 0
      %p191 = por %p189, %p190
      %p192 = scmp.ne.s32.totalorder %s184, %s186
      %p193 = scmp.eq.s32.totalorder %s22, 1
      %p194 = por %p192, %p193
      %p195 = scmp.ne.s32.totalorder %s186, %s187
      %p196 = scmp.eq.s32.totalorder %s22, 0
      %p197 = por %p195, %p196
      %p198 = scmp.ne.s32.totalorder %s186, %s187
      %p199 = scmp.eq.s32.totalorder %s23, 1
      %p200 = por %p198, %p199
      %p202 = scmp.ne.s32.totalorder %s187, %s201
      %p203 = scmp.eq.s32.totalorder %s23, 0
      %p204 = por %p202, %p203
      %s205 = ssub.s32 %s24, %s43
      %s206 = ssub.s32 %s25, %s39
      %s207 = sor.u32 %s205, %s206
      %p208 = scmp.eq.s32.totalorder %s207, 0
      %s210 = sadd.s32 %s209, 1
      %s211 = scalar_select %p208, %s209, %s210
      %p214 = pneg %p208
      %p215 = scmp.eq.s32.totalorder %s17, 1
      %p216 = por %p214, %p215
      %p217 = scmp.ne.s32.totalorder %s209, %s212
      %p218 = scmp.eq.s32.totalorder %s17, 0
      %p219 = por %p217, %p218
      %p220 = scmp.ne.s32.totalorder %s209, %s212
      %p221 = scmp.eq.s32.totalorder %s22, 1
      %p222 = por %p220, %p221
      %p223 = scmp.ne.s32.totalorder %s212, %s213
      %p224 = scmp.eq.s32.totalorder %s22, 0
      %p225 = por %p223, %p224
      %p226 = scmp.ne.s32.totalorder %s212, %s213
      %p227 = scmp.eq.s32.totalorder %s23, 1
      %p228 = por %p226, %p227
      %p230 = scmp.ne.s32.totalorder %s213, %s229
      %p231 = scmp.eq.s32.totalorder %s23, 0
      %p232 = por %p230, %p231
      %p233 = scmp.le.s32.totalorder 1, %s17
      %p234 = scmp.lt.s32.totalorder %s17, 3
      %p235 = pnand %p233, %p234
      %p236 = pneg %p235
      // Predicated region
      $region9: #{tpu_custom_call.1} parent=5 // pred_check
        _
      $region10: #{tpu_custom_call.1} parent=5 // pred_check_branch
        %238 = sbr.rel (%p235) target = $region12
      $region11: #{tpu_custom_call.1} parent=5 // pred_region
        %s239 = ssub.s32 %s17, 1
        // Predicated region
        $region13: #{tpu_custom_call.1} parent=11 // pred_check
          %p240 = pneg %p113
        $region14: #{tpu_custom_call.1} parent=11 // pred_check_branch
          %242 = sbr.rel (%p240) target = $region16
        $region15: #{tpu_custom_call.1} parent=11 // pred_region
          _
        $region16: #{tpu_custom_call.1} parent=11 // pred_fallthru
          _
        // Predicated region
        $region17: #{tpu_custom_call.1} parent=11 // pred_check
          %p243 = pneg %p134
        $region18: #{tpu_custom_call.1} parent=11 // pred_check_branch
          %245 = sbr.rel (%p243) target = $region20
        $region19: #{tpu_custom_call.1} parent=11 // pred_region
          _
        $region20: #{tpu_custom_call.1} parent=11 // pred_fallthru
          _
        // Predicated region
        $region21: #{tpu_custom_call.1} parent=11 // pred_check
          %p246 = pneg %p155
        $region22: #{tpu_custom_call.1} parent=11 // pred_check_branch
          %248 = sbr.rel (%p246) target = $region24
        $region23: #{tpu_custom_call.1} parent=11 // pred_region
          %250 = vsyncadd [#allocation7], 0
          %s252 = sshll.u32 %s4, 4
          %s253 = int_to_ptr.hbm [resolvable:$true] %s252
          %s254 = sshll.u32 [#allocation6], 4
          %s255 = int_to_ptr.vmem [resolvable:$true] %s254
          %257 = dma.hbm_to_vmem [thread:$0]  %s253, 128, %s255, [#allocation7]
        $region24: #{tpu_custom_call.1} parent=11 // pred_fallthru
          _
        // Predicated region
        $region25: #{tpu_custom_call.1} parent=11 // pred_check
          %p258 = pneg %p176
        $region26: #{tpu_custom_call.1} parent=11 // pred_check_branch
          %260 = sbr.rel (%p258) target = $region28
        $region27: #{tpu_custom_call.1} parent=11 // pred_region
          _
        $region28: #{tpu_custom_call.1} parent=11 // pred_fallthru
          _
        // Predicated region
        $region29: #{tpu_custom_call.1} parent=11 // pred_check
          %p261 = pneg %p197
        $region30: #{tpu_custom_call.1} parent=11 // pred_check_branch
          %263 = sbr.rel (%p261) target = $region32
        $region31: #{tpu_custom_call.1} parent=11 // pred_region
          _
        $region32: #{tpu_custom_call.1} parent=11 // pred_fallthru
          _
      $region12: #{tpu_custom_call.1} parent=5 // pred_fallthru
        _
      %p264 = scmp.lt.s32.totalorder %s17, 2
      // Predicated region
      $region33: #{tpu_custom_call.1} parent=5 // pred_check
        %p265 = pneg %p264
      $region34: #{tpu_custom_call.1} parent=5 // pred_check_branch
        %267 = sbr.rel (%p265) target = $region36
      $region35: #{tpu_custom_call.1} parent=5 // pred_region
        // Predicated region
        $region37: #{tpu_custom_call.1} parent=35 // pred_check
          %p268 = pneg %p58
        $region38: #{tpu_custom_call.1} parent=35 // pred_check_branch
          %270 = sbr.rel (%p268) target = $region40
        $region39: #{tpu_custom_call.1} parent=35 // pred_region
          %p271 = scmp.lt.s32.totalorder %s24, 1
          %s272 = scalar_select %p271, %s24, 1
          %p273 = scmp.lt.s32.totalorder %s25, 0
          %s274 = scalar_select %p273, %s25, 0
          %s275 = sadd.s32 %s274, %s272
          %s276 = smul.addr %s275, 8
          %s277 = scalar_lea.vmem %s0, %s276
        $region40: #{tpu_custom_call.1} parent=35 // pred_fallthru
          _
        // Predicated region
        $region41: #{tpu_custom_call.1} parent=35 // pred_check
          %p278 = pneg %p86
        $region42: #{tpu_custom_call.1} parent=35 // pred_check_branch
          %280 = sbr.rel (%p278) target = $region44
        $region43: #{tpu_custom_call.1} parent=35 // pred_region
          %p281 = scmp.lt.s32.totalorder %s24, 1
          %s282 = scalar_select %p281, %s24, 1
          %p283 = scmp.lt.s32.totalorder %s26, 0
          %s284 = scalar_select %p283, %s26, 0
          %s285 = sadd.s32 %s284, %s282
          %s286 = smul.addr %s285, 8
          %s287 = scalar_lea.vmem %s1, %s286
        $region44: #{tpu_custom_call.1} parent=35 // pred_fallthru
          _
      $region36: #{tpu_custom_call.1} parent=5 // pred_fallthru
        _
      %p288 = scmp.le.s32.totalorder 1, %s17
      %p289 = scmp.lt.s32.totalorder %s17, 3
      %p290 = pnand %p288, %p289
      %p291 = pneg %p290
      // Predicated region
      $region45: #{tpu_custom_call.1} parent=5 // pred_check
        _
      $region46: #{tpu_custom_call.1} parent=5 // pred_check_branch
        %293 = sbr.rel (%p290) target = $region48
      $region47: #{tpu_custom_call.1} parent=5 // pred_region
        %s294 = ssub.s32 %s17, 1
        // Predicated region
        $region49: #{tpu_custom_call.1} parent=47 // pred_check
          %p295 = pneg %p155
        $region50: #{tpu_custom_call.1} parent=47 // pred_check_branch
          %297 = sbr.rel (%p295) target = $region52
        $region51: #{tpu_custom_call.1} parent=47 // pred_region
          %299 = dma.done [#allocation7], 128
        $region52: #{tpu_custom_call.1} parent=47 // pred_fallthru
          _
        %p300 = scmp.lt.s32.totalorder %s27, 1
        %s301 = scalar_select %p300, %s27, 1
        %p302 = scmp.lt.s32.totalorder %s28, 0
        %s303 = scalar_select %p302, %s28, 0
        %s304 = sadd.s32 %s303, %s301
        %s305 = smul.addr %s304, 8
        %s306 = scalar_lea.vmem %s0, %s305
        %p307 = pneg %p64
        %p308 = pneg %p61
        %p309 = scmp.lt.s32.totalorder %s27, 1
        %s310 = scalar_select %p309, %s27, 1
        %p311 = scmp.lt.s32.totalorder %s29, 0
        %s312 = scalar_select %p311, %s29, 0
        %s313 = sadd.s32 %s312, %s310
        %s314 = smul.addr %s313, 8
        %s315 = scalar_lea.vmem %s1, %s314
        %p316 = pneg %p92
        %p317 = pneg %p89
        %p318 = pneg %p113
        %p319 = pneg %p110
        %p320 = pneg %p134
        %p321 = pneg %p131
        %p322 = pneg %p155
        %p323 = pneg %p152
        %p324 = pneg %p176
        %p325 = pneg %p173
        %p326 = pneg %p197
        %p327 = pneg %p194
        %p328 = pneg %p225
        %p329 = pneg %p222
        %s330 = sand.u32 %s212, 1
        %s331 = scalar_lea.sflag [#allocation8], %s330
        %s332 = sand.u32 %s212, 1
        %s333 = smul.addr %s332, 8
        %s334 = scalar_lea.vmem [#allocation9], %s333
        %p335 = scmp.lt.s32.totalorder %s27, 1
        %s336 = scalar_select %p335, %s27, 1
        %p337 = scmp.lt.s32.totalorder %s28, 0
        %s338 = scalar_select %p337, %s28, 0
        %s339 = sadd.s32 %s338, %s336
        %s340 = smul.addr %s339, 8
        %s341 = scalar_lea.vmem %s0, %s340
        %p342 = scmp.lt.s32.totalorder %s27, 1
        %s343 = scalar_select %p342, %s27, 1
        %p344 = scmp.lt.s32.totalorder %s29, 0
        %s345 = scalar_select %p344, %s29, 0
        %s346 = sadd.s32 %s345, %s343
        %s347 = smul.addr %s346, 8
        %s348 = scalar_lea.vmem %s1, %s347
        %p349 = scmp.eq.s32.totalorder %s29, 0
        // Predicated region
        $region53: #{tpu_custom_call.1} parent=47 // pred_check
          %p350 = pneg %p349
        $region54: #{tpu_custom_call.1} parent=47 // pred_check_branch
          %352 = sbr.rel (%p350) target = $region56
        $region55: #{tpu_custom_call.1} parent=47 // pred_region
          %v353 = vld [vmem:[%s341] sm:$0xff]
          %v354 = vld [vmem:[%s2] sm:$0xff]
          %vm355 = vcmask 64512
          %v357 = vsel %vm355, %v353, 0
          %359 = vmatpush.msra.mxu0 0.0
          %360 = vmatpush.msra.mxu0 0.0
          %361 = vmatpush.msra.mxu0 0.0
          %362 = vmatpush.msra.mxu0 0.0
          %363 = vmatpush.msra.mxu0 0.0
          %364 = vmatpush.msra.mxu0 0.0
          %365 = vmatpush.msra.mxu0 0.0
          %366 = vmatpush.msra.mxu0 0.0
          %367 = vmatpush.msra.mxu0 0.0
          %368 = vmatpush.msra.mxu0 0.0
          %369 = vmatpush.msra.mxu0 0.0
          %370 = vmatpush.msra.mxu0 0.0
          %371 = vmatpush.msra.mxu0 0.0
          %372 = vmatpush.msra.mxu0 0.0
          %373 = vmatpush.msra.mxu0 0.0
          %374 = vmatpush.msra.mxu0 %v354
          %375 = vmatmul.f32.gmra.mxu0 %v357
          %v376 = vpop.f32.mrf.mxu0
          %v377 = vadd.f32 0.0, %v376
          %378 = vdwg.mxu0
          %v379 = vmul.f32 %v377, 0.25
          %381 = vrot.lane.b32.xlu0 %v379, 112
          %v382 = vpop.permute.xlu0 %381
          %v384 = vrot.slane %v379, 4
          %vm385 = vcmask 1047556
          %v386 = vsel %vm385, 0.0, %v384
          %v388 = vunpack.c.l.s4 1983009808
          %v389 = vunpack.c.0.s8 %v388
          %v390 = vperm.slane %v379, %v389
          %v392 = vunpack.c.l.s4 1983009808
          %v393 = vunpack.c.0.s8 %v392
          %v394 = vperm.slane %v386, %v393
          %v395 = vrot.slane %v382, 4
          %v396 = vsel %vm385, 0.0, %v395
          %v398 = vunpack.c.l.s4 1983009808
          %v399 = vunpack.c.0.s8 %v398
          %v400 = vperm.slane %v382, %v399
          %v402 = vunpack.c.l.s4 1983009808
          %v403 = vunpack.c.0.s8 %v402
          %v404 = vperm.slane %v396, %v403
          %v405 = vrot.slane %v400, 4
          %v406 = vsel %vm385, %v405, %v390
          %v407 = vrot.slane %v390, 4
          %v408 = vsel %vm385, %v400, %v407
          %v410 = vunpack.c.l.s4 1934713408
          %v411 = vunpack.c.0.s8 %v410
          %v412 = vperm.slane %v406, %v411
          %v414 = vunpack.c.l.s4 1934713408
          %v415 = vunpack.c.0.s8 %v414
          %v416 = vperm.slane %v408, %v415
          %v417 = vrot.slane %v404, 4
          %v418 = vsel %vm385, %v417, %v394
          %v419 = vrot.slane %v394, 4
          %v420 = vsel %vm385, %v404, %v419
          %v422 = vunpack.c.l.s4 1934713408
          %v423 = vunpack.c.0.s8 %v422
          %v424 = vperm.slane %v418, %v423
          %v426 = vunpack.c.l.s4 1934713408
          %v427 = vunpack.c.0.s8 %v426
          %v428 = vperm.slane %v420, %v427
          %v429 = vrot.slane %v412, 4
          %v430 = vsel %vm385, 0.0, %v429
          %v431 = vrot.slane %v416, 4
          %v432 = vsel %vm385, 0.0, %v431
          %v433 = vrot.slane %v424, 4
          %v434 = vsel %vm385, 0.0, %v433
          %v435 = vrot.slane %v428, 4
          %v436 = vsel %vm385, 0.0, %v435
          %v437 = vsel %vm385, %v431, %v412
          %v439 = vunpack.c.l.s4 1983009808
          %v440 = vunpack.c.0.s8 %v439
          %v441 = vperm.slane %v437, %v440
          %v442 = vrot.slane %v432, 4
          %v443 = vsel %vm385, %v442, %v430
          %v445 = vunpack.c.l.s4 1983009808
          %v446 = vunpack.c.0.s8 %v445
          %v447 = vperm.slane %v443, %v446
          %v448 = vsel %vm385, %v435, %v424
          %v450 = vunpack.c.l.s4 1983009808
          %v451 = vunpack.c.0.s8 %v450
          %v452 = vperm.slane %v448, %v451
          %v453 = vrot.slane %v436, 4
          %v454 = vsel %vm385, %v453, %v434
          %v456 = vunpack.c.l.s4 1983009808
          %v457 = vunpack.c.0.s8 %v456
          %v458 = vperm.slane %v454, %v457
          %v459 = vrot.slane %v447, 4
          %v460 = vsel %vm385, %v459, %v441
          %v462 = vunpack.c.l.s4 1934713408
          %v463 = vunpack.c.0.s8 %v462
          %v464 = vperm.slane %v460, %v463
          %v465 = vrot.slane %v458, 4
          %v466 = vsel %vm385, %v465, %v452
          %v468 = vunpack.c.l.s4 1934713408
          %v469 = vunpack.c.0.s8 %v468
          %v470 = vperm.slane %v466, %v469
          %v471 = vrot.slane %v470, 4
          %v472 = vsel %vm385, %v471, %v464
          %v473 = vrot.slane %v464, 4
          %v474 = vsel %vm385, %v470, %v473
          %vm475 = vcmask 130048
          %476 = vst.msk [vmem:[#allocation2] sm:$0xff] %vm475, %v472
          %477 = vst.msk [vmem:[#allocation2 + $0x8] sm:$0xff] %vm475, %v474
          %vm478 = vcmask 7168
          %479 = vst.msk [vmem:[#allocation3] sm:$0xff] %vm478, -inf
          %480 = vst.msk [vmem:[#allocation3 + $0x8] sm:$0xff] %vm478, -inf
          %481 = vst.msk [vmem:[#allocation4] sm:$0xff] %vm478, 0.0
          %482 = vst.msk [vmem:[#allocation4 + $0x8] sm:$0xff] %vm478, 0.0
          %483 = vst.msk [vmem:[#allocation5] sm:$0xff] %vm475, 0.0
          %484 = vst.msk [vmem:[#allocation5 + $0x8] sm:$0xff] %vm475, 0.0
        $region56: #{tpu_custom_call.1} parent=47 // pred_fallthru
          _
        %v485 = vld [vmem:[%s348] sm:$0xff]
        %v486 = vld [vmem:[%s3] sm:$0xff]
        %vm487 = vcmask 64512
        %v489 = vsel %vm487, %v485, 0
        %491 = vmatpush.msra.mxu0 0.0
        %492 = vmatpush.msra.mxu0 0.0
        %493 = vmatpush.msra.mxu0 0.0
        %494 = vmatpush.msra.mxu0 0.0
        %495 = vmatpush.msra.mxu0 0.0
        %496 = vmatpush.msra.mxu0 0.0
        %497 = vmatpush.msra.mxu0 0.0
        %498 = vmatpush.msra.mxu0 0.0
        %499 = vmatpush.msra.mxu0 0.0
        %500 = vmatpush.msra.mxu0 0.0
        %501 = vmatpush.msra.mxu0 0.0
        %502 = vmatpush.msra.mxu0 0.0
        %503 = vmatpush.msra.mxu0 0.0
        %504 = vmatpush.msra.mxu0 0.0
        %505 = vmatpush.msra.mxu0 0.0
        %506 = vmatpush.msra.mxu0 %v486
        %507 = vmatmul.f32.gmra.mxu0 %v489
        %v508 = vpop.f32.mrf.mxu0
        %v509 = vadd.f32 0.0, %v508
        %510 = vdwg.mxu0
        %v511 = vld [vmem:[#allocation6] sm:$0xff]
        %512 = vmatpush.msra.mxu0 0.0
        %513 = vmatpush.msra.mxu0 0.0
        %514 = vmatpush.msra.mxu0 0.0
        %515 = vmatpush.msra.mxu0 0.0
        %516 = vmatpush.msra.mxu0 0.0
        %517 = vmatpush.msra.mxu0 0.0
        %518 = vmatpush.msra.mxu0 0.0
        %519 = vmatpush.msra.mxu0 0.0
        %520 = vmatpush.msra.mxu0 0.0
        %521 = vmatpush.msra.mxu0 0.0
        %522 = vmatpush.msra.mxu0 0.0
        %523 = vmatpush.msra.mxu0 0.0
        %524 = vmatpush.msra.mxu0 0.0
        %525 = vmatpush.msra.mxu0 0.0
        %526 = vmatpush.msra.mxu0 0.0
        %527 = vmatpush.msra.mxu0 %v511
        %528 = vmatmul.f32.gmra.mxu0 %v489
        %v529 = vpop.f32.mrf.mxu0
        %v530 = vadd.f32 0.0, %v529
        %531 = vdwg.mxu0
        %533 = vrot.lane.b32.xlu0 %v509, 112
        %v534 = vpop.permute.xlu0 %533
        %v536 = vrot.slane %v509, 4
        %vm537 = vcmask 1047556
        %v538 = vsel %vm537, 0.0, %v536
        %v540 = vunpack.c.l.s4 1983009808
        %v541 = vunpack.c.0.s8 %v540
        %v542 = vperm.slane %v509, %v541
        %v544 = vunpack.c.l.s4 1983009808
        %v545 = vunpack.c.0.s8 %v544
        %v546 = vperm.slane %v538, %v545
        %v547 = vrot.slane %v534, 4
        %v548 = vsel %vm537, 0.0, %v547
        %v550 = vunpack.c.l.s4 1983009808
        %v551 = vunpack.c.0.s8 %v550
        %v552 = vperm.slane %v534, %v551
        %v554 = vunpack.c.l.s4 1983009808
        %v555 = vunpack.c.0.s8 %v554
        %v556 = vperm.slane %v548, %v555
        %v557 = vrot.slane %v552, 4
        %v558 = vsel %vm537, %v557, %v542
        %v559 = vrot.slane %v542, 4
        %v560 = vsel %vm537, %v552, %v559
        %v562 = vunpack.c.l.s4 1934713408
        %v563 = vunpack.c.0.s8 %v562
        %v564 = vperm.slane %v558, %v563
        %v566 = vunpack.c.l.s4 1934713408
        %v567 = vunpack.c.0.s8 %v566
        %v568 = vperm.slane %v560, %v567
        %v569 = vrot.slane %v556, 4
        %v570 = vsel %vm537, %v569, %v546
        %v571 = vrot.slane %v546, 4
        %v572 = vsel %vm537, %v556, %v571
        %v574 = vunpack.c.l.s4 1934713408
        %v575 = vunpack.c.0.s8 %v574
        %v576 = vperm.slane %v570, %v575
        %v578 = vunpack.c.l.s4 1934713408
        %v579 = vunpack.c.0.s8 %v578
        %v580 = vperm.slane %v572, %v579
        %v581 = vrot.slane %v564, 4
        %v582 = vsel %vm537, 0.0, %v581
        %v583 = vrot.slane %v568, 4
        %v584 = vsel %vm537, 0.0, %v583
        %v585 = vrot.slane %v576, 4
        %v586 = vsel %vm537, 0.0, %v585
        %v587 = vrot.slane %v580, 4
        %v588 = vsel %vm537, 0.0, %v587
        %v589 = vsel %vm537, %v583, %v564
        %v591 = vunpack.c.l.s4 1983009808
        %v592 = vunpack.c.0.s8 %v591
        %v593 = vperm.slane %v589, %v592
        %v594 = vrot.slane %v584, 4
        %v595 = vsel %vm537, %v594, %v582
        %v597 = vunpack.c.l.s4 1983009808
        %v598 = vunpack.c.0.s8 %v597
        %v599 = vperm.slane %v595, %v598
        %v600 = vsel %vm537, %v587, %v576
        %v602 = vunpack.c.l.s4 1983009808
        %v603 = vunpack.c.0.s8 %v602
        %v604 = vperm.slane %v600, %v603
        %v605 = vrot.slane %v588, 4
        %v606 = vsel %vm537, %v605, %v586
        %v608 = vunpack.c.l.s4 1983009808
        %v609 = vunpack.c.0.s8 %v608
        %v610 = vperm.slane %v606, %v609
        %v611 = vrot.slane %v599, 4
        %v612 = vsel %vm537, %v611, %v593
        %v614 = vunpack.c.l.s4 1934713408
        %v615 = vunpack.c.0.s8 %v614
        %v616 = vperm.slane %v612, %v615
        %v617 = vrot.slane %v610, 4
        %v618 = vsel %vm537, %v617, %v604
        %v620 = vunpack.c.l.s4 1934713408
        %v621 = vunpack.c.0.s8 %v620
        %v622 = vperm.slane %v618, %v621
        %v623 = vrot.slane %v622, 4
        %v624 = vsel %vm537, %v623, %v616
        %v625 = vrot.slane %v616, 4
        %v626 = vsel %vm537, %v622, %v625
        %628 = vrot.lane.b32.xlu0 %v530, 112
        %v629 = vpop.permute.xlu0 %628
        %v631 = vrot.slane %v530, 4
        %v632 = vsel %vm537, 0.0, %v631
        %v634 = vunpack.c.l.s4 1983009808
        %v635 = vunpack.c.0.s8 %v634
        %v636 = vperm.slane %v530, %v635
        %v638 = vunpack.c.l.s4 1983009808
        %v639 = vunpack.c.0.s8 %v638
        %v640 = vperm.slane %v632, %v639
        %v641 = vrot.slane %v629, 4
        %v642 = vsel %vm537, 0.0, %v641
        %v644 = vunpack.c.l.s4 1983009808
        %v645 = vunpack.c.0.s8 %v644
        %v646 = vperm.slane %v629, %v645
        %v648 = vunpack.c.l.s4 1983009808
        %v649 = vunpack.c.0.s8 %v648
        %v650 = vperm.slane %v642, %v649
        %v651 = vrot.slane %v646, 4
        %v652 = vsel %vm537, %v651, %v636
        %v653 = vrot.slane %v636, 4
        %v654 = vsel %vm537, %v646, %v653
        %v656 = vunpack.c.l.s4 1934713408
        %v657 = vunpack.c.0.s8 %v656
        %v658 = vperm.slane %v652, %v657
        %v660 = vunpack.c.l.s4 1934713408
        %v661 = vunpack.c.0.s8 %v660
        %v662 = vperm.slane %v654, %v661
        %v663 = vrot.slane %v650, 4
        %v664 = vsel %vm537, %v663, %v640
        %v665 = vrot.slane %v640, 4
        %v666 = vsel %vm537, %v650, %v665
        %v668 = vunpack.c.l.s4 1934713408
        %v669 = vunpack.c.0.s8 %v668
        %v670 = vperm.slane %v664, %v669
        %v672 = vunpack.c.l.s4 1934713408
        %v673 = vunpack.c.0.s8 %v672
        %v674 = vperm.slane %v666, %v673
        %v675 = vrot.slane %v658, 4
        %v676 = vsel %vm537, 0.0, %v675
        %v677 = vrot.slane %v662, 4
        %v678 = vsel %vm537, 0.0, %v677
        %v679 = vrot.slane %v670, 4
        %v680 = vsel %vm537, 0.0, %v679
        %v681 = vrot.slane %v674, 4
        %v682 = vsel %vm537, 0.0, %v681
        %v683 = vsel %vm537, %v677, %v658
        %v685 = vunpack.c.l.s4 1983009808
        %v686 = vunpack.c.0.s8 %v685
        %v687 = vperm.slane %v683, %v686
        %v688 = vrot.slane %v678, 4
        %v689 = vsel %vm537, %v688, %v676
        %v691 = vunpack.c.l.s4 1983009808
        %v692 = vunpack.c.0.s8 %v691
        %v693 = vperm.slane %v689, %v692
        %v694 = vsel %vm537, %v681, %v670
        %v696 = vunpack.c.l.s4 1983009808
        %v697 = vunpack.c.0.s8 %v696
        %v698 = vperm.slane %v694, %v697
        %v699 = vrot.slane %v682, 4
        %v700 = vsel %vm537, %v699, %v680
        %v702 = vunpack.c.l.s4 1983009808
        %v703 = vunpack.c.0.s8 %v702
        %v704 = vperm.slane %v700, %v703
        %v705 = vrot.slane %v693, 4
        %v706 = vsel %vm537, %v705, %v687
        %v708 = vunpack.c.l.s4 1934713408
        %v709 = vunpack.c.0.s8 %v708
        %v710 = vperm.slane %v706, %v709
        %v711 = vrot.slane %v704, 4
        %v712 = vsel %vm537, %v711, %v698
        %v714 = vunpack.c.l.s4 1934713408
        %v715 = vunpack.c.0.s8 %v714
        %v716 = vperm.slane %v712, %v715
        %v717 = vrot.slane %v716, 4
        %v718 = vsel %vm537, %v717, %v710
        %v719 = vrot.slane %v710, 4
        %v720 = vsel %vm537, %v716, %v719
        %v721 = vld [vmem:[#allocation2] sm:$0xff]
        %v722 = vld [vmem:[#allocation2 + $0x8] sm:$0xff]
        %vm723 = vcmask 130048
        %v725 = vsel %vm723, %v721, 0
        %v728 = vsel %vm723, %v624, 0
        %730 = vmatpush.xpose.msra.mxu0 0.0
        %731 = vmatpush.xpose.msra.mxu0 0.0
        %732 = vmatpush.xpose.msra.mxu0 0.0
        %733 = vmatpush.xpose.msra.mxu0 0.0
        %734 = vmatpush.xpose.msra.mxu0 0.0
        %735 = vmatpush.xpose.msra.mxu0 0.0
        %736 = vmatpush.xpose.msra.mxu0 0.0
        %737 = vmatpush.xpose.msra.mxu0 0.0
        %738 = vmatpush.xpose.msra.mxu0 0.0
        %739 = vmatpush.xpose.msra.mxu0 0.0
        %740 = vmatpush.xpose.msra.mxu0 0.0
        %741 = vmatpush.xpose.msra.mxu0 0.0
        %742 = vmatpush.xpose.msra.mxu0 0.0
        %743 = vmatpush.xpose.msra.mxu0 0.0
        %744 = vmatpush.xpose.msra.mxu0 0.0
        %745 = vmatpush.xpose.msra.mxu0 %v728
        %746 = vmatmul.f32.gmra.mxu0 %v725
        %v747 = vpop.f32.mrf.mxu0
        %v748 = vadd.f32 0.0, %v747
        %749 = vdwg.mxu0
        %v751 = vsel %vm723, %v722, 0
        %v754 = vsel %vm723, %v626, 0
        %756 = vmatpush.xpose.msra.mxu0 0.0
        %757 = vmatpush.xpose.msra.mxu0 0.0
        %758 = vmatpush.xpose.msra.mxu0 0.0
        %759 = vmatpush.xpose.msra.mxu0 0.0
        %760 = vmatpush.xpose.msra.mxu0 0.0
        %761 = vmatpush.xpose.msra.mxu0 0.0
        %762 = vmatpush.xpose.msra.mxu0 0.0
        %763 = vmatpush.xpose.msra.mxu0 0.0
        %764 = vmatpush.xpose.msra.mxu0 0.0
        %765 = vmatpush.xpose.msra.mxu0 0.0
        %766 = vmatpush.xpose.msra.mxu0 0.0
        %767 = vmatpush.xpose.msra.mxu0 0.0
        %768 = vmatpush.xpose.msra.mxu0 0.0
        %769 = vmatpush.xpose.msra.mxu0 0.0
        %770 = vmatpush.xpose.msra.mxu0 0.0
        %771 = vmatpush.xpose.msra.mxu0 %v754
        %772 = vmatmul.f32.gmra.mxu0 %v751
        %v773 = vpop.f32.mrf.mxu0
        %v774 = vadd.f32 0.0, %v773
        %775 = vdwg.mxu0
        %v776 = vld [vmem:[#allocation3] sm:$0xff]
        %v777 = vld [vmem:[#allocation3 + $0x8] sm:$0xff]
        %v778 = vsel %vm487, %v748, -inf
        %779 = vmax.xlane.f32.xlu0 %v778
        %v780 = vpop.xlane.xlu0 %779
        %v781 = vsel %vm487, %v774, -inf
        %782 = vmax.xlane.f32.xlu0 %v781
        %v783 = vpop.xlane.xlu0 %782
        %v784 = vmax.f32 %v776, %v780
        %v785 = vmax.f32 %v777, %v783
        %v786 = vsub.f32 %v776, %v784
        %v787 = vsub.f32 %v777, %v785
        %v788 = vmul.f32 %v786, 1.442695
        %v789 = vpow.pop %v788
        %v790 = vmul.f32 %v787, 1.442695
        %v791 = vpow.pop %v790
        %793 = vset.pattern.permute.xlu0 0
        %794 = vperm.xlu0 %793, %v784
        %v795 = vpop.permute.xlu0 %794
        %798 = vset.pattern.permute.xlu0 0
        %799 = vperm.xlu0 %798, %v785
        %v800 = vpop.permute.xlu0 %799
        %v802 = vsub.f32 %v748, %v795
        %v803 = vsub.f32 %v774, %v800
        %v804 = vmul.f32 %v802, 1.442695
        %v805 = vpow.pop %v804
        %v806 = vmul.f32 %v803, 1.442695
        %v807 = vpow.pop %v806
        %v808 = vld [vmem:[#allocation4] sm:$0xff]
        %v809 = vld [vmem:[#allocation4 + $0x8] sm:$0xff]
        %v810 = vmul.f32 %v789, %v808
        %v811 = vmul.f32 %v791, %v809
        %v812 = vsel %vm487, %v805, 0.0
        %813 = vadd.xlane.f32.xlu0 %v812
        %v814 = vpop.xlane.xlu0 %813
        %v815 = vsel %vm487, %v807, 0.0
        %816 = vadd.xlane.f32.xlu0 %v815
        %v817 = vpop.xlane.xlu0 %816
        %v818 = vadd.f32 %v810, %v814
        %v819 = vadd.f32 %v811, %v817
        %vm820 = vcmask 7168
        %821 = vst.msk [vmem:[#allocation4] sm:$0xff] %vm820, %v818
        %822 = vst.msk [vmem:[#allocation4 + $0x8] sm:$0xff] %vm820, %v819
        %v823 = vld [vmem:[#allocation5] sm:$0xff]
        %v824 = vld [vmem:[#allocation5 + $0x8] sm:$0xff]
        %826 = vset.pattern.permute.xlu0 0
        %827 = vperm.xlu0 %826, %v789
        %v828 = vpop.permute.xlu0 %827
        %831 = vset.pattern.permute.xlu0 0
        %832 = vperm.xlu0 %831, %v791
        %v833 = vpop.permute.xlu0 %832
        %v835 = vmul.f32 %v828, %v823
        %v836 = vmul.f32 %v833, %v824
        %v838 = vsel %vm487, %v805, 0
        %840 = vmatpush.msra.mxu0 0.0
        %841 = vmatpush.msra.mxu0 0.0
        %842 = vmatpush.msra.mxu0 0.0
        %843 = vmatpush.msra.mxu0 0.0
        %844 = vmatpush.msra.mxu0 0.0
        %845 = vmatpush.msra.mxu0 0.0
        %846 = vmatpush.msra.mxu0 0.0
        %847 = vmatpush.msra.mxu0 0.0
        %848 = vmatpush.msra.mxu0 0.0
        %849 = vmatpush.msra.mxu0 0.0
        %850 = vmatpush.msra.mxu0 0.0
        %851 = vmatpush.msra.mxu0 0.0
        %852 = vmatpush.msra.mxu0 0.0
        %853 = vmatpush.msra.mxu0 0.0
        %854 = vmatpush.msra.mxu0 0.0
        %855 = vmatpush.msra.mxu0 %v718
        %856 = vmatmul.f32.gmra.mxu0 %v838
        %v857 = vpop.f32.mrf.mxu0
        %v858 = vadd.f32 0.0, %v857
        %859 = vdwg.mxu0
        %v861 = vsel %vm487, %v807, 0
        %863 = vmatpush.msra.mxu0 0.0
        %864 = vmatpush.msra.mxu0 0.0
        %865 = vmatpush.msra.mxu0 0.0
        %866 = vmatpush.msra.mxu0 0.0
        %867 = vmatpush.msra.mxu0 0.0
        %868 = vmatpush.msra.mxu0 0.0
        %869 = vmatpush.msra.mxu0 0.0
        %870 = vmatpush.msra.mxu0 0.0
        %871 = vmatpush.msra.mxu0 0.0
        %872 = vmatpush.msra.mxu0 0.0
        %873 = vmatpush.msra.mxu0 0.0
        %874 = vmatpush.msra.mxu0 0.0
        %875 = vmatpush.msra.mxu0 0.0
        %876 = vmatpush.msra.mxu0 0.0
        %877 = vmatpush.msra.mxu0 0.0
        %878 = vmatpush.msra.mxu0 %v720
        %879 = vmatmul.f32.gmra.mxu0 %v861
        %v880 = vpop.f32.mrf.mxu0
        %v881 = vadd.f32 0.0, %v880
        %882 = vdwg.mxu0
        %v883 = vadd.f32 %v835, %v858
        %v884 = vadd.f32 %v836, %v881
        %885 = vst.msk [vmem:[#allocation5] sm:$0xff] %vm723, %v883
        %886 = vst.msk [vmem:[#allocation5 + $0x8] sm:$0xff] %vm723, %v884
        %887 = vst.msk [vmem:[#allocation3] sm:$0xff] %vm820, %v784
        %888 = vst.msk [vmem:[#allocation3 + $0x8] sm:$0xff] %vm820, %v785
        // Predicated region
        $region57: #{tpu_custom_call.1} parent=47 // pred_check
          %p889 = pneg %p349
        $region58: #{tpu_custom_call.1} parent=47 // pred_check_branch
          %891 = sbr.rel (%p889) target = $region60
        $region59: #{tpu_custom_call.1} parent=47 // pred_region
          %v892 = vld [vmem:[#allocation5] sm:$0xff]
          %v893 = vld [vmem:[#allocation5 + $0x8] sm:$0xff]
          %v894 = vld [vmem:[#allocation4] sm:$0xff]
          %v895 = vld [vmem:[#allocation4 + $0x8] sm:$0xff]
          %v896 = vrcp.pop %v894
          %v897 = vrcp.pop %v895
          %899 = vset.pattern.permute.xlu0 0
          %900 = vperm.xlu0 %899, %v896
          %v901 = vpop.permute.xlu0 %900
          %904 = vset.pattern.permute.xlu0 0
          %905 = vperm.xlu0 %904, %v897
          %v906 = vpop.permute.xlu0 %905
          %v908 = vmul.f32 %v892, %v901
          %v909 = vmul.f32 %v893, %v906
          %v910 = vld [vmem:[%s5] sm:$0xff]
          %v911 = vld [vmem:[%s5 + $0x8] sm:$0xff]
          %v912 = vld [vmem:[%s5 + $0x10] sm:$0xff]
          %v913 = vld [vmem:[%s5 + $0x18] sm:$0xff]
          %v915 = vsel %vm723, %v908, 0
          %917 = vmatpush.msra.mxu0 0.0
          %918 = vmatpush.msra.mxu0 0.0
          %919 = vmatpush.msra.mxu0 0.0
          %920 = vmatpush.msra.mxu0 0.0
          %921 = vmatpush.msra.mxu0 0.0
          %922 = vmatpush.msra.mxu0 0.0
          %923 = vmatpush.msra.mxu0 0.0
          %924 = vmatpush.msra.mxu0 0.0
          %925 = vmatpush.msra.mxu0 0.0
          %926 = vmatpush.msra.mxu0 0.0
          %927 = vmatpush.msra.mxu0 0.0
          %928 = vmatpush.msra.mxu0 0.0
          %929 = vmatpush.msra.mxu0 0.0
          %930 = vmatpush.msra.mxu0 0.0
          %931 = vmatpush.msra.mxu0 %v911
          %932 = vmatpush.msra.mxu0 %v910
          %933 = vmatmul.f32.gmra.mxu0 %v915
          %v934 = vpop.f32.mrf.mxu0
          %v935 = vadd.f32 0.0, %v934
          %936 = vdwg.mxu0
          %v938 = vsel %vm723, %v909, 0
          %940 = vmatpush.msra.mxu0 0.0
          %941 = vmatpush.msra.mxu0 0.0
          %942 = vmatpush.msra.mxu0 0.0
          %943 = vmatpush.msra.mxu0 0.0
          %944 = vmatpush.msra.mxu0 0.0
          %945 = vmatpush.msra.mxu0 0.0
          %946 = vmatpush.msra.mxu0 0.0
          %947 = vmatpush.msra.mxu0 0.0
          %948 = vmatpush.msra.mxu0 0.0
          %949 = vmatpush.msra.mxu0 0.0
          %950 = vmatpush.msra.mxu0 0.0
          %951 = vmatpush.msra.mxu0 0.0
          %952 = vmatpush.msra.mxu0 0.0
          %953 = vmatpush.msra.mxu0 0.0
          %954 = vmatpush.msra.mxu0 %v913
          %955 = vmatpush.msra.mxu0 %v912
          %956 = vmatmul.f32.gmra.mxu0 %v938
          %v957 = vpop.f32.mrf.mxu0
          %v958 = vadd.f32 0.0, %v957
          %959 = vdwg.mxu0
          %v960 = vsel %vm487, %v935, 0.0
          %v961 = vsel %vm487, %v958, 0.0
          %v962 = vadd.f32 %v960, %v961
          %v963 = vld [vmem:[%s6] sm:$0x1]
          %v965 = vperm.slane %v963, 0
          %v967 = vadd.f32 %v962, %v965
          %968 = vst.msk [vmem:[%s334] sm:$0xff] %vm487, %v967
        $region60: #{tpu_custom_call.1} parent=47 // pred_fallthru
          _
        %s969 = sand.u32 %s212, 1
        %s970 = scalar_lea.sflag [#allocation8], %s969
        %s971 = sand.u32 %s212, 1
        %s972 = smul.addr %s971, 8
        %s973 = scalar_lea.vmem [#allocation9], %s972
        // Predicated region
        $region61: #{tpu_custom_call.1} parent=47 // pred_check
          %p974 = pneg %p222
        $region62: #{tpu_custom_call.1} parent=47 // pred_check_branch
          %976 = sbr.rel (%p974) target = $region64
        $region63: #{tpu_custom_call.1} parent=47 // pred_region
          %978 = vsyncadd %s970, 0
          %s979 = sadd.s32 %s28, %s27
          %s980 = smul.addr %s979, 8
          %s981 = scalar_lea.hbm %s7, %s980
          %s983 = sshll.u32 %s973, 4
          %s984 = int_to_ptr.vmem [resolvable:$true] %s983
          %s985 = sshll.u32 %s981, 4
          %s986 = int_to_ptr.hbm [resolvable:$true] %s985
          %988 = dma.vmem_to_hbm [thread:$0]  %s984, 128, %s986, %s970
        $region64: #{tpu_custom_call.1} parent=47 // pred_fallthru
          _
      $region48: #{tpu_custom_call.1} parent=5 // pred_fallthru
        _
      %p989 = scmp.le.s32.totalorder 2, %s17
      // Predicated region
      $region65: #{tpu_custom_call.1} parent=5 // pred_check
        %p990 = pneg %p989
      $region66: #{tpu_custom_call.1} parent=5 // pred_check_branch
        %992 = sbr.rel (%p990) target = $region68
      $region67: #{tpu_custom_call.1} parent=5 // pred_region
        %s993 = ssub.s32 %s17, 2
        // Predicated region
        $region69: #{tpu_custom_call.1} parent=67 // pred_check
          %p994 = pneg %p228
        $region70: #{tpu_custom_call.1} parent=67 // pred_check_branch
          %996 = sbr.rel (%p994) target = $region72
        $region71: #{tpu_custom_call.1} parent=67 // pred_region
          %s997 = sand.u32 %s213, 1
          %s998 = scalar_lea.sflag [#allocation8], %s997
          %s999 = sand.u32 %s213, 1
          %s1000 = smul.addr %s999, 8
          %s1001 = scalar_lea.vmem [#allocation9], %s1000
          %1003 = dma.done %s998, 128
        $region72: #{tpu_custom_call.1} parent=67 // pred_fallthru
          _
      $region68: #{tpu_custom_call.1} parent=5 // pred_fallthru
        _
    $region6: #{tpu_custom_call.1} parent=1 // loop_footer
      %s21 = sadd.s32 1, %s17
    $region7: #{tpu_custom_call.1} parent=1 // loop_footer_branch
      %16 = sbr.rel target = $region3
    $region8: #{tpu_custom_call.1} parent=1 // loop_exit
      _
    %1004 = vsyncpa [#allocation7], 1
    %s1005 = scalar_lea.sflag [#allocation7], 1
    %1006 = vsyncpa %s1005, 1
    %1007 = vsyncpa [#allocation8], 1
    %s1008 = scalar_lea.sflag [#allocation8], 1
    %1009 = vsyncpa %s1008, 1

</llo_original>
